<compile_context>
chip_gen: v6e
topology: v6e:2x2x1
jax: 0.10.0
libtpu: 0.0.40
codegen_flags: <defaults>
</compile_context>

<pallas_src>
import functools

import jax
import jax.numpy as jnp
from jax.experimental import pallas as pl
from jax.experimental.pallas import tpu as pltpu

_LANES = 128
_MAX_BLOCK_ROWS = 8192          # up to 8192 x 128 rows per block
_MAX_BLOCK_BYTES = 4 * 2 ** 20  # cap any single input block at 4 MiB


@functools.lru_cache(maxsize=1)
def _num_tensorcores():
    """Best-effort TensorCores-per-chip count (2 on v7x, 1 on v5e/v6e)."""
    try:
        info = pltpu.get_tpu_info()
        for name in ("num_tensorcores", "tensorcore_count", "num_cores",
                     "num_cores_per_chip", "core_count"):
            v = getattr(info, name, None)
            if isinstance(v, int) and 1 <= v <= 8:
                return v
    except Exception:
        pass
    try:
        v = getattr(jax.devices()[0], "num_cores", None)
        if isinstance(v, int) and 1 <= v <= 8:
            return v
    except Exception:
        pass
    return 2  # safe default: an extra (cheap) outer pass on single-TC chips


def _hinge_sum_jax(x, mode):
    """Plain-JAX hinge sum for tiny tails (< 128 elements)."""
    xf = x.astype(jnp.float32)
    if mode == "real":
        return jnp.sum(jnp.maximum(1.0 - xf, 0.0))
    if mode == "fake":
        return jnp.sum(jnp.maximum(1.0 + xf, 0.0))
    return jnp.sum(xf)


def _hinge_sum_kernel(rows_ref, *refs, modes, block_rows):
    """Fused hinge-sum streaming reduction.

    refs = (in_0..in_{k-1}, out_0..out_{k-1}, acc_0..acc_{k-1})
      in_x  : (block_rows, 128) block of input x (original dtype)
      out_x : (1, 8, 128) f32 partial-sum block (one row per outer grid index)
      acc_x : (8, 128) f32 VMEM accumulator (lives across the inner axis)
    rows_ref: SMEM (k,) int32 -- true (unpadded) row count of each input.
    """
    k = len(modes)
    in_refs = refs[:k]
    out_refs = refs[k:2 * k]
    acc_refs = refs[2 * k:]

    o = pl.program_id(0)
    i = pl.program_id(1)
    inner = pl.num_programs(1)

    @pl.when(i == 0)
    def _init():
        for acc in acc_refs:
            acc[...] = jnp.zeros((8, _LANES), jnp.float32)

    # Logical row range covered by this grid step (un-clamped, so steps past an
    # input's extent are detected and skipped / masked).
    row0 = (o * inner + i) * block_rows
    row_end = row0 + block_rows

    for idx in range(k):
        mode = modes[idx]
        rows = rows_ref[idx]

        def hinge(x, mode=mode):
            xf = x.astype(jnp.float32)
            if mode == "real":      # relu(1 - x)
                return jnp.maximum(1.0 - xf, 0.0)
            if mode == "fake":      # relu(1 + x)
                return jnp.maximum(1.0 + xf, 0.0)
            return xf               # plain sum

        def fold(v):
            # Per-vreg VPU adds over the leading axis -> one (8, 128) vreg.
            return jnp.sum(v.reshape(block_rows // 8, 8, _LANES), axis=0)

        is_full = row_end <= rows
        is_partial = jnp.logical_and(row0 < rows, jnp.logical_not(is_full))

        @pl.when(is_full)                      # hot path: zero mask work
        def _fast(idx=idx, hinge=hinge, fold=fold):
            acc_refs[idx][...] += fold(hinge(in_refs[idx][...]))

        @pl.when(is_partial)                   # ragged / padded tail block only
        def _masked(idx=idx, hinge=hinge, fold=fold, rows=rows):
            v = hinge(in_refs[idx][...])
            row_ids = row0 + jax.lax.broadcasted_iota(
                jnp.int32, (block_rows, _LANES), 0)
            acc_refs[idx][...] += fold(jnp.where(row_ids < rows, v, 0.0))
        # row0 >= rows: clamped duplicate block -> contributes nothing (skip).

    @pl.when(i == inner - 1)
    def _finish():
        for idx in range(k):
            out_refs[idx][...] = acc_refs[idx][...].reshape(1, 8, _LANES)


def _hinge_sums(inputs, modes):
    """Returns [sum(f_mode(x)) for x, mode in zip(inputs, modes)] (f32 scalars)."""
    k = len(inputs)
    results = [None] * k

    # Split each input into a copy-free (rows, 128) slab plus an optional
    # <128-element lane tail (reduced on the JAX side).  Inputs smaller than
    # one full row are handled entirely in JAX.
    kernel_items = []  # (orig_pos, slab, true_rows, mode, tail_sum_or_None)
    for pos, (x, mode) in enumerate(zip(inputs, modes)):
        flat = jnp.ravel(x)                       # contiguous reshape, no copy
        n = flat.shape[0]
        rows = n // _LANES
        tail = n - rows * _LANES
        tail_sum = _hinge_sum_jax(flat[rows * _LANES:], mode) if tail else None
        if rows == 0:
            results[pos] = tail_sum if tail_sum is not None else jnp.float32(0.0)
            continue
        body = flat if tail == 0 else flat[: rows * _LANES]
        kernel_items.append((pos, body.reshape(rows, _LANES), rows, mode, tail_sum))

    if kernel_items:
        positions, slabs, rows_list, kmodes, tails = zip(*kernel_items)
        kk = len(slabs)

        itemsize = max(s.dtype.itemsize for s in slabs)
        packing = max(8, 32 // itemsize)          # f32 -> 8, bf16 -> 16, i8 -> 32
        cap = max(packing,
                  (min(_MAX_BLOCK_ROWS, _MAX_BLOCK_BYTES // (_LANES * itemsize))
                   // packing) * packing)
        max_rows = max(rows_list)
        block_rows = min(cap, max(packing, (max_rows // packing) * packing))

        # Inputs smaller than one block get a cheap (<= ~4 MiB) zero row-pad so
        # no block dimension ever exceeds its array extent; padded rows are
        # masked out in-kernel via the true row count.
        padded = []
        for slab, rows in zip(slabs, rows_list):
            if rows < block_rows:
                slab = jnp.pad(slab, ((0, block_rows - rows), (0, 0)))
            padded.append(slab)
        slabs = padded

        nblks = [pl.cdiv(r, block_rows) for r in rows_list]
        nblocks = max(nblks)
        n_outer = max(1, min(_num_tensorcores(), nblocks))
        inner_steps = pl.cdiv(nblocks, n_outer)

        def make_in_spec(nblk):
            def idx_map(o, i, rows_smem):
                # Clamp: grid steps past this input's last block re-present the
                # last block; their contribution is skipped in-kernel.
                return (jnp.minimum(o * inner_steps + i, nblk - 1), 0)
            return pl.BlockSpec((block_rows, _LANES), idx_map)

        in_specs = [make_in_spec(nblk) for nblk in nblks]
        out_specs = tuple(
            pl.BlockSpec((1, 8, _LANES), lambda o, i, rows_smem: (o, 0, 0))
            for _ in range(kk))
        out_shapes = tuple(
            jax.ShapeDtypeStruct((n_outer, 8, _LANES), jnp.float32)
            for _ in range(kk))
        scratch = [pltpu.VMEM((8, _LANES), jnp.float32) for _ in range(kk)]

        dbuf_bytes = sum(2 * block_rows * _LANES * s.dtype.itemsize for s in slabs)
        vmem_limit = int(max(32 << 20, min(48 << 20, dbuf_bytes + (8 << 20))))

        in_bytes = sum(int(s.size) * s.dtype.itemsize for s in slabs)
        out_bytes = kk * n_outer * 8 * _LANES * 4
        cost = pl.CostEstimate(flops=3 * sum(int(s.size) for s in slabs),
                               transcendentals=0,
                               bytes_accessed=in_bytes + out_bytes)

        rows_arr = jnp.asarray(rows_list, dtype=jnp.int32)

        partials = pl.pallas_call(
            functools.partial(_hinge_sum_kernel, modes=tuple(kmodes),
                              block_rows=block_rows),
            out_shape=out_shapes,
            grid_spec=pltpu.PrefetchScalarGridSpec(
                num_scalar_prefetch=1,
                grid=(n_outer, inner_steps),
                in_specs=in_specs,
                out_specs=out_specs,
                scratch_shapes=scratch,
            ),
            compiler_params=pltpu.CompilerParams(
                # "parallel" lets the outer axis shard across TensorCores on
                # multi-TC chips and is a plain sequential loop otherwise.
                dimension_semantics=("parallel", "arbitrary"),
                vmem_limit_bytes=vmem_limit,
            ),
            cost_estimate=cost,
        )(rows_arr, *slabs)

        if not isinstance(partials, (tuple, list)):
            partials = (partials,)
        for j, pos in enumerate(positions):
            s = jnp.sum(partials[j])               # tiny (n_outer, 8, 128) reduce
            if tails[j] is not None:
                s = s + tails[j]
            results[pos] = s

    return results


def hinge_loss(real, fake=None):
    """JAX/Pallas equivalent of HingeLoss.forward."""
    if fake is not None:
        # Fused: one kernel launch / one pipeline over both inputs, regardless
        # of whether their sizes match (per-input clamping + masking handles it).
        s_real, s_fake = _hinge_sums([real, fake], ["real", "fake"])
        return s_real / jnp.float32(real.size) + s_fake / jnp.float32(fake.size)
    # Generator branch: -mean(real).
    (s,) = _hinge_sums([real], ["sum"])
    return -s / jnp.float32(real.size)


def _reference(real, fake=None):
    if fake is not None:
        return (jnp.mean(jnp.maximum(1.0 - real, 0.0))
                + jnp.mean(jnp.maximum(1.0 + fake, 0.0)))
    return -jnp.mean(real)


if __name__ == "__main__":
    key = jax.random.PRNGKey(0)
    k1, k2, k3, k4 = jax.random.split(key, 4)

    # Discriminator-logit-like inputs (NCHW shape, typical GAN usage).
    real = jax.random.normal(k1, (2, 4, 16, 16), dtype=jnp.float32)
    fake = jax.random.normal(k2, (2, 4, 16, 16), dtype=jnp.float32)

    # Mode 1: discriminator hinge loss (fused real + fake reduction).
    loss_d = jax.block_until_ready(hinge_loss(real, fake))
    ref_d = _reference(real, fake)
    assert jnp.allclose(loss_d, ref_d, rtol=1e-5, atol=1e-5), (loss_d, ref_d)

    # Mode 2: generator hinge loss (-mean(real)).
    loss_g = jax.block_until_ready(hinge_loss(real))
    ref_g = _reference(real)
    assert jnp.allclose(loss_g, ref_g, rtol=1e-5, atol=1e-5), (loss_g, ref_g)

    # Ragged tiny shape (<128 elems): handled entirely on the JAX tail path.
    real2 = jax.random.normal(k3, (3, 5, 7), dtype=jnp.float32)
    fake2 = jax.random.normal(k4, (3, 5, 7), dtype=jnp.float32)
    loss_d2 = jax.block_until_ready(hinge_loss(real2, fake2))
    ref_d2 = _reference(real2, fake2)
    assert jnp.allclose(loss_d2, ref_d2, rtol=1e-5, atol=1e-5), (loss_d2, ref_d2)

    # Unequal sizes fused in one kernel: exercises the masked tail-block path,
    # the clamped/skip path, the small-slab row pad and the JAX lane tail.
    real3 = jax.random.normal(k1, (4, 1000), dtype=jnp.float32)       # 4000 elems
    fake3 = jax.random.normal(k2, (2, 4, 16, 16), dtype=jnp.float32)  # 2048 elems
    loss_d3 = jax.block_until_ready(hinge_loss(real3, fake3))
    ref_d3 = _reference(real3, fake3)
    assert jnp.allclose(loss_d3, ref_d3, rtol=1e-5, atol=1e-5), (loss_d3, ref_d3)

    print("KERNEL_OK")
</pallas_src>

<mosaic_0001>
module attributes {stable_mosaic.version = 11 : i64} {
  func.func @_hinge_sum_kernel(%arg0: i32, %arg1: i32, %arg2: memref<2xi32, #tpu.memory_space<smem>>, %arg3: memref<16x128xf32, #tpu.memory_space<vmem>>, %arg4: memref<16x128xf32, #tpu.memory_space<vmem>>, %arg5: memref<1x8x128xf32, #tpu.memory_space<vmem>>, %arg6: memref<1x8x128xf32, #tpu.memory_space<vmem>>, %arg7: memref<8x128xf32, #tpu.memory_space<vmem>>, %arg8: memref<8x128xf32, #tpu.memory_space<vmem>>) attributes {dimension_semantics = [#tpu.dimension_semantics<parallel>, #tpu.dimension_semantics<arbitrary>], iteration_bounds = array<i64: 1, 1>, scalar_prefetch = 1 : i64, scratch_operands = 2 : i64, tpu.core_type = #tpu.core_type<tc>, window_params = [{transform_indices = @transform_0, window_bounds = array<i64: 16, 128>}, {transform_indices = @transform_1, window_bounds = array<i64: 16, 128>}, {transform_indices = @transform_2, window_bounds = array<i64: 1, 8, 128>}, {transform_indices = @transform_3, window_bounds = array<i64: 1, 8, 128>}]} {
    %c0_i32 = arith.constant 0 : i32
    %0 = arith.cmpi eq, %arg1, %c0_i32 : i32
    %1 = arith.extui %0 : i1 to i32
    %c0_i32_0 = arith.constant 0 : i32
    %2 = arith.cmpi ne, %1, %c0_i32_0 : i32
    scf.if %2 {
      %cst = arith.constant 0.000000e+00 : f32
      %28 = vector.broadcast %cst : f32 to vector<8x128xf32>
      %c0_9 = arith.constant 0 : index
      %c0_10 = arith.constant 0 : index
      %29 = vector.load %arg7[%c0_9, %c0_10] : memref<8x128xf32, #tpu.memory_space<vmem>>, vector<8x128xf32>
      tpu.vector_store %arg7[%c0_9, %c0_10], %28 {strides = array<i32>} : memref<8x128xf32, #tpu.memory_space<vmem>>, vector<8x128xf32>,
      %cst_11 = arith.constant 0.000000e+00 : f32
      %30 = vector.broadcast %cst_11 : f32 to vector<8x128xf32>
      %c0_12 = arith.constant 0 : index
      %c0_13 = arith.constant 0 : index
      %31 = vector.load %arg8[%c0_12, %c0_13] : memref<8x128xf32, #tpu.memory_space<vmem>>, vector<8x128xf32>
      tpu.vector_store %arg8[%c0_12, %c0_13], %30 {strides = array<i32>} : memref<8x128xf32, #tpu.memory_space<vmem>>, vector<8x128xf32>,
    } else {
    }
    %c1_i32 = arith.constant 1 : i32
    %3 = arith.muli %arg0, %c1_i32 : i32
    %4 = arith.addi %3, %arg1 : i32
    %c16_i32 = arith.constant 16 : i32
    %5 = arith.muli %4, %c16_i32 : i32
    %c16_i32_1 = arith.constant 16 : i32
    %6 = arith.addi %5, %c16_i32_1 : i32
    %c0 = arith.constant 0 : index
    %7 = memref.load %arg2[%c0] : memref<2xi32, #tpu.memory_space<smem>>
    %8 = arith.cmpi sle, %6, %7 : i32
    %9 = arith.cmpi slt, %5, %7 : i32
    %true = arith.constant true
    %10 = arith.xori %8, %true : i1
    %11 = arith.andi %9, %10 : i1
    %12 = arith.extui %8 : i1 to i32
    %c0_i32_2 = arith.constant 0 : i32
    %13 = arith.cmpi ne, %12, %c0_i32_2 : i32
    scf.if %13 {
      %c0_9 = arith.constant 0 : index
      %c0_10 = arith.constant 0 : index
      %28 = vector.load %arg7[%c0_9, %c0_10] : memref<8x128xf32, #tpu.memory_space<vmem>>, vector<8x128xf32>
      %c0_11 = arith.constant 0 : index
      %c0_12 = arith.constant 0 : index
      %29 = vector.load %arg3[%c0_11, %c0_12] : memref<16x128xf32, #tpu.memory_space<vmem>>, vector<16x128xf32>
      %cst = arith.constant 1.000000e+00 : f32
      %30 = vector.broadcast %cst : f32 to vector<16x128xf32>
      %31 = arith.subf %30, %29 : vector<16x128xf32>
      %cst_13 = arith.constant 0.000000e+00 : f32
      %32 = vector.broadcast %cst_13 : f32 to vector<16x128xf32>
      %33 = arith.maximumf %31, %32 : vector<16x128xf32>
      %34 = vector.shape_cast %33 : vector<16x128xf32> to vector<2x8x128xf32>
      %cst_14 = arith.constant dense<0.000000e+00> : vector<8x128xf32>
      %35 = vector.multi_reduction <add>, %34, %cst_14 [0] : vector<2x8x128xf32> to vector<8x128xf32>
      %36 = arith.addf %28, %35 : vector<8x128xf32>
      %c0_15 = arith.constant 0 : index
      %c0_16 = arith.constant 0 : index
      %37 = vector.load %arg7[%c0_15, %c0_16] : memref<8x128xf32, #tpu.memory_space<vmem>>, vector<8x128xf32>
      tpu.vector_store %arg7[%c0_15, %c0_16], %36 {strides = array<i32>} : memref<8x128xf32, #tpu.memory_space<vmem>>, vector<8x128xf32>,
    } else {
    }
    %14 = arith.extui %11 : i1 to i32
    %c0_i32_3 = arith.constant 0 : i32
    %15 = arith.cmpi ne, %14, %c0_i32_3 : i32
    scf.if %15 {
      %c0_9 = arith.constant 0 : index
      %c0_10 = arith.constant 0 : index
      %28 = vector.load %arg3[%c0_9, %c0_10] : memref<16x128xf32, #tpu.memory_space<vmem>>, vector<16x128xf32>
      %cst = arith.constant 1.000000e+00 : f32
      %29 = vector.broadcast %cst : f32 to vector<16x128xf32>
      %30 = arith.subf %29, %28 : vector<16x128xf32>
      %cst_11 = arith.constant 0.000000e+00 : f32
      %31 = vector.broadcast %cst_11 : f32 to vector<16x128xf32>
      %32 = arith.maximumf %30, %31 : vector<16x128xf32>
      %33 = tpu.iota {dimensions = array<i32: 0>} : vector<16x128xi32>
      %34 = vector.broadcast %5 : i32 to vector<16x128xi32>
      %35 = arith.addi %34, %33 : vector<16x128xi32>
      %c0_12 = arith.constant 0 : index
      %c0_13 = arith.constant 0 : index
      %36 = vector.load %arg7[%c0_12, %c0_13] : memref<8x128xf32, #tpu.memory_space<vmem>>, vector<8x128xf32>
      %37 = vector.broadcast %7 : i32 to vector<16x128xi32>
      %38 = arith.cmpi slt, %35, %37 : vector<16x128xi32>
      %cst_14 = arith.constant 0.000000e+00 : f32
      %39 = vector.broadcast %cst_14 : f32 to vector<16x128xf32>
      %40 = arith.select %38, %32, %39 : vector<16x128xi1>, vector<16x128xf32>
      %41 = vector.shape_cast %40 : vector<16x128xf32> to vector<2x8x128xf32>
      %cst_15 = arith.constant dense<0.000000e+00> : vector<8x128xf32>
      %42 = vector.multi_reduction <add>, %41, %cst_15 [0] : vector<2x8x128xf32> to vector<8x128xf32>
      %43 = arith.addf %36, %42 : vector<8x128xf32>
      %c0_16 = arith.constant 0 : index
      %c0_17 = arith.constant 0 : index
      %44 = vector.load %arg7[%c0_16, %c0_17] : memref<8x128xf32, #tpu.memory_space<vmem>>, vector<8x128xf32>
      tpu.vector_store %arg7[%c0_16, %c0_17], %43 {strides = array<i32>} : memref<8x128xf32, #tpu.memory_space<vmem>>, vector<8x128xf32>,
    } else {
    }
    %c1 = arith.constant 1 : index
    %16 = memref.load %arg2[%c1] : memref<2xi32, #tpu.memory_space<smem>>
    %17 = arith.cmpi sle, %6, %16 : i32
    %18 = arith.cmpi slt, %5, %16 : i32
    %true_4 = arith.constant true
    %19 = arith.xori %17, %true_4 : i1
    %20 = arith.andi %18, %19 : i1
    %21 = arith.extui %17 : i1 to i32
    %c0_i32_5 = arith.constant 0 : i32
    %22 = arith.cmpi ne, %21, %c0_i32_5 : i32
    scf.if %22 {
      %c0_9 = arith.constant 0 : index
      %c0_10 = arith.constant 0 : index
      %28 = vector.load %arg8[%c0_9, %c0_10] : memref<8x128xf32, #tpu.memory_space<vmem>>, vector<8x128xf32>
      %c0_11 = arith.constant 0 : index
      %c0_12 = arith.constant 0 : index
      %29 = vector.load %arg4[%c0_11, %c0_12] : memref<16x128xf32, #tpu.memory_space<vmem>>, vector<16x128xf32>
      %cst = arith.constant 1.000000e+00 : f32
      %30 = vector.broadcast %cst : f32 to vector<16x128xf32>
      %31 = arith.addf %30, %29 : vector<16x128xf32>
      %cst_13 = arith.constant 0.000000e+00 : f32
      %32 = vector.broadcast %cst_13 : f32 to vector<16x128xf32>
      %33 = arith.maximumf %31, %32 : vector<16x128xf32>
      %34 = vector.shape_cast %33 : vector<16x128xf32> to vector<2x8x128xf32>
      %cst_14 = arith.constant dense<0.000000e+00> : vector<8x128xf32>
      %35 = vector.multi_reduction <add>, %34, %cst_14 [0] : vector<2x8x128xf32> to vector<8x128xf32>
      %36 = arith.addf %28, %35 : vector<8x128xf32>
      %c0_15 = arith.constant 0 : index
      %c0_16 = arith.constant 0 : index
      %37 = vector.load %arg8[%c0_15, %c0_16] : memref<8x128xf32, #tpu.memory_space<vmem>>, vector<8x128xf32>
      tpu.vector_store %arg8[%c0_15, %c0_16], %36 {strides = array<i32>} : memref<8x128xf32, #tpu.memory_space<vmem>>, vector<8x128xf32>,
    } else {
    }
    %23 = arith.extui %20 : i1 to i32
    %c0_i32_6 = arith.constant 0 : i32
    %24 = arith.cmpi ne, %23, %c0_i32_6 : i32
    scf.if %24 {
      %c0_9 = arith.constant 0 : index
      %c0_10 = arith.constant 0 : index
      %28 = vector.load %arg4[%c0_9, %c0_10] : memref<16x128xf32, #tpu.memory_space<vmem>>, vector<16x128xf32>
      %cst = arith.constant 1.000000e+00 : f32
      %29 = vector.broadcast %cst : f32 to vector<16x128xf32>
      %30 = arith.addf %29, %28 : vector<16x128xf32>
      %cst_11 = arith.constant 0.000000e+00 : f32
      %31 = vector.broadcast %cst_11 : f32 to vector<16x128xf32>
      %32 = arith.maximumf %30, %31 : vector<16x128xf32>
      %33 = tpu.iota {dimensions = array<i32: 0>} : vector<16x128xi32>
      %34 = vector.broadcast %5 : i32 to vector<16x128xi32>
      %35 = arith.addi %34, %33 : vector<16x128xi32>
      %c0_12 = arith.constant 0 : index
      %c0_13 = arith.constant 0 : index
      %36 = vector.load %arg8[%c0_12, %c0_13] : memref<8x128xf32, #tpu.memory_space<vmem>>, vector<8x128xf32>
      %37 = vector.broadcast %16 : i32 to vector<16x128xi32>
      %38 = arith.cmpi slt, %35, %37 : vector<16x128xi32>
      %cst_14 = arith.constant 0.000000e+00 : f32
      %39 = vector.broadcast %cst_14 : f32 to vector<16x128xf32>
      %40 = arith.select %38, %32, %39 : vector<16x128xi1>, vector<16x128xf32>
      %41 = vector.shape_cast %40 : vector<16x128xf32> to vector<2x8x128xf32>
      %cst_15 = arith.constant dense<0.000000e+00> : vector<8x128xf32>
      %42 = vector.multi_reduction <add>, %41, %cst_15 [0] : vector<2x8x128xf32> to vector<8x128xf32>
      %43 = arith.addf %36, %42 : vector<8x128xf32>
      %c0_16 = arith.constant 0 : index
      %c0_17 = arith.constant 0 : index
      %44 = vector.load %arg8[%c0_16, %c0_17] : memref<8x128xf32, #tpu.memory_space<vmem>>, vector<8x128xf32>
      tpu.vector_store %arg8[%c0_16, %c0_17], %43 {strides = array<i32>} : memref<8x128xf32, #tpu.memory_space<vmem>>, vector<8x128xf32>,
    } else {
    }
    %c0_i32_7 = arith.constant 0 : i32
    %25 = arith.cmpi eq, %arg1, %c0_i32_7 : i32
    %26 = arith.extui %25 : i1 to i32
    %c0_i32_8 = arith.constant 0 : i32
    %27 = arith.cmpi ne, %26, %c0_i32_8 : i32
    scf.if %27 {
      %c0_9 = arith.constant 0 : index
      %c0_10 = arith.constant 0 : index
      %28 = vector.load %arg7[%c0_9, %c0_10] : memref<8x128xf32, #tpu.memory_space<vmem>>, vector<8x128xf32>
      %29 = vector.shape_cast %28 : vector<8x128xf32> to vector<1x8x128xf32>
      %c0_11 = arith.constant 0 : index
      %c0_12 = arith.constant 0 : index
      %c0_13 = arith.constant 0 : index
      %30 = vector.load %arg5[%c0_11, %c0_12, %c0_13] : memref<1x8x128xf32, #tpu.memory_space<vmem>>, vector<1x8x128xf32>
      tpu.vector_store %arg5[%c0_11, %c0_12, %c0_13], %29 {strides = array<i32>} : memref<1x8x128xf32, #tpu.memory_space<vmem>>, vector<1x8x128xf32>,
      %c0_14 = arith.constant 0 : index
      %c0_15 = arith.constant 0 : index
      %31 = vector.load %arg8[%c0_14, %c0_15] : memref<8x128xf32, #tpu.memory_space<vmem>>, vector<8x128xf32>
      %32 = vector.shape_cast %31 : vector<8x128xf32> to vector<1x8x128xf32>
      %c0_16 = arith.constant 0 : index
      %c0_17 = arith.constant 0 : index
      %c0_18 = arith.constant 0 : index
      %33 = vector.load %arg6[%c0_16, %c0_17, %c0_18] : memref<1x8x128xf32, #tpu.memory_space<vmem>>, vector<1x8x128xf32>
      tpu.vector_store %arg6[%c0_16, %c0_17, %c0_18], %32 {strides = array<i32>} : memref<1x8x128xf32, #tpu.memory_space<vmem>>, vector<1x8x128xf32>,
    } else {
    }
    return
  }
  func.func @transform_0(%arg0: i32, %arg1: i32, %arg2: memref<2xi32, #tpu.memory_space<smem>>) -> (i32, i32) {
    %c1_i32 = arith.constant 1 : i32
    %0 = arith.muli %arg0, %c1_i32 : i32
    %1 = arith.addi %0, %arg1 : i32
    %c0_i32 = arith.constant 0 : i32
    %2 = arith.minsi %1, %c0_i32 : i32
    %c0_i32_0 = arith.constant 0 : i32
    %c0_i32_1 = arith.constant 0 : i32
    return %2, %c0_i32_0 : i32, i32
  }
  func.func @transform_1(%arg0: i32, %arg1: i32, %arg2: memref<2xi32, #tpu.memory_space<smem>>) -> (i32, i32) {
    %c1_i32 = arith.constant 1 : i32
    %0 = arith.muli %arg0, %c1_i32 : i32
    %1 = arith.addi %0, %arg1 : i32
    %c0_i32 = arith.constant 0 : i32
    %2 = arith.minsi %1, %c0_i32 : i32
    %c0_i32_0 = arith.constant 0 : i32
    %c0_i32_1 = arith.constant 0 : i32
    return %2, %c0_i32_0 : i32, i32
  }
  func.func @transform_2(%arg0: i32, %arg1: i32, %arg2: memref<2xi32, #tpu.memory_space<smem>>) -> (i32, i32, i32) {
    %c0_i32 = arith.constant 0 : i32
    %c0_i32_0 = arith.constant 0 : i32
    %c0_i32_1 = arith.constant 0 : i32
    return %arg0, %c0_i32, %c0_i32_0 : i32, i32, i32
  }
  func.func @transform_3(%arg0: i32, %arg1: i32, %arg2: memref<2xi32, #tpu.memory_space<smem>>) -> (i32, i32, i32) {
    %c0_i32 = arith.constant 0 : i32
    %c0_i32_0 = arith.constant 0 : i32
    %c0_i32_1 = arith.constant 0 : i32
    return %arg0, %c0_i32, %c0_i32_0 : i32, i32, i32
  }
}

</mosaic_0001>

<llo_original>
// kernel: tpu_custom_call.1
$region0: #{tpu_custom_call.1}
  #allocation0 [shape = 'u32[]', space=smem, size = 0x4, offset = 0x4, fixed_abs, tag = 'smem constant byte address 0x4 - core index']
  #allocation1 [shape = 'u32[144,128]{1,0:T(1,128)}', space=vmem, size = 0x12000, scoped, tag = 'internal scratch']
  #allocation2 [shape = 'f32[8,128]{1,0:T(8,128)}', space=vmem, size = 0x1000, scoped, tag = 'scratch operand']
  #allocation3 [shape = 'f32[8,128]{1,0:T(8,128)}', space=vmem, size = 0x1000, scoped, tag = 'scratch operand']
  #allocation4 [shape = 's32[1]{0}', space=sflag, size = 0x4, scoped, tag = 'scoped memory for tpu_custom_call.1']
  #allocation5 [shape = 'u8[512]{0}', space=smem, size = 0x200, scoped, tag = 'prefetched SMEM operand 0']
  %s0 = inlined_call_operand.hbm [shape: s32[2], index: 0, kind: input, shape index: {}]
  %s1 = inlined_call_operand.hbm [shape: f32[16,128], index: 1, kind: input, shape index: {}]
  %s2 = inlined_call_operand.hbm [shape: f32[16,128], index: 2, kind: input, shape index: {}]
  %s3 = inlined_call_operand.hbm [shape: f32[1,8,128], index: 3, kind: output, shape index: {0}]
  %s4 = inlined_call_operand.hbm [shape: f32[1,8,128], index: 4, kind: output, shape index: {1}]
  %5 = xla_tuple %s3, %s4
  %s6 = sld [smem:[#allocation0]]
  $region58: #{tpu_custom_call.1} parent=0
    _
  %s8 = ssub.s32 1, %s6
  %s9 = scalar_select 0, %s8, %s6
  %11 = dma.hbm_to_smem %s0, 16, [#allocation5], [#allocation4]
  %12 = dma.done [#allocation4], 16
  %13 = sfence
  $region1: #{tpu_custom_call.1} parent=0
    #allocation6 [shape = 'u8[8192]{0}', space=vmem, size = 0x2000, scoped, tag = 'input window, operand 1, single buffered']
    #allocation7 [shape = 's32[1]{0}', space=sflag, size = 0x4, scoped, tag = 'scoped memory for tpu_custom_call.1']
    #allocation8 [shape = 's32[1]{0}', space=sflag, size = 0x4, scoped, tag = 'scoped memory for tpu_custom_call.1']
    #allocation9 [shape = 'u8[8192]{0}', space=vmem, size = 0x2000, scoped, tag = 'input window, operand 2, single buffered']
    #allocation10 [shape = 's32[1]{0}', space=sflag, size = 0x4, scoped, tag = 'scoped memory for tpu_custom_call.1']
    #allocation11 [shape = 'u8[4096]{0}', space=vmem, size = 0x1000, scoped, tag = 'output window, operand 0, single buffered']
    #allocation12 [shape = 'u8[4096]{0}', space=vmem, size = 0x1000, scoped, tag = 'output window, operand 1, single buffered']
    #allocation13 [shape = 's32[1]{0}', space=sflag, size = 0x4, scoped, tag = 'scoped memory for tpu_custom_call.1']
    %14 = vsyncpa [#allocation7], 0
    %15 = vsyncpa [#allocation10], 0
    %16 = vsyncpa [#allocation8], 0
    %17 = vsyncpa [#allocation13], 0
    // Predicated region
    $region2: #{tpu_custom_call.1} parent=1 // pred_check
      _
    $region3: #{tpu_custom_call.1} parent=1 // pred_check_branch
      %19 = sbr.rel (0) target = $region5
    $region4: #{tpu_custom_call.1} parent=1 // pred_region
      %s20 = sadd.s32 0, 0
      %p21 = scmp.lt.s32.totalorder %s20, 0
      %s22 = scalar_select %p21, %s20, 0
      %s23 = smul.u32 2, %s22
      %s25 = ssub.s32 256, 256
      %26 = vsyncadd [#allocation7], %s25
      %s27 = smul.addr %s23, 128
      %s28 = scalar_lea.hbm %s1, %s27
      %s29 = sshll.u32 [#allocation6], 4
      %s30 = int_to_ptr.vmem [resolvable:$true] %s29
      %35 = dma.hbm_to_vmem [thread:$0]  %s28, 256, %s30, [#allocation7], 128, 128, 8
    $region5: #{tpu_custom_call.1} parent=1 // pred_fallthru
      _
    // Predicated region
    $region6: #{tpu_custom_call.1} parent=1 // pred_check
      _
    $region7: #{tpu_custom_call.1} parent=1 // pred_check_branch
      %37 = sbr.rel (0) target = $region9
    $region8: #{tpu_custom_call.1} parent=1 // pred_region
      %s38 = sadd.s32 0, 0
      %p39 = scmp.lt.s32.totalorder %s38, 0
      %s40 = scalar_select %p39, %s38, 0
      %s41 = smul.u32 2, %s40
      %s43 = ssub.s32 256, 256
      %44 = vsyncadd [#allocation10], %s43
      %s45 = smul.addr %s41, 128
      %s46 = scalar_lea.hbm %s2, %s45
      %s47 = sshll.u32 [#allocation9], 4
      %s48 = int_to_ptr.vmem [resolvable:$true] %s47
      %53 = dma.hbm_to_vmem [thread:$0]  %s46, 256, %s48, [#allocation10], 128, 128, 8
    $region9: #{tpu_custom_call.1} parent=1 // pred_fallthru
      _
    // Predicated region
    $region10: #{tpu_custom_call.1} parent=1 // pred_check
      _
    $region11: #{tpu_custom_call.1} parent=1 // pred_check_branch
      %55 = sbr.rel (0) target = $region13
    $region12: #{tpu_custom_call.1} parent=1 // pred_region
      %56 = dma.done [#allocation7], 256
    $region13: #{tpu_custom_call.1} parent=1 // pred_fallthru
      _
    // Predicated region
    $region14: #{tpu_custom_call.1} parent=1 // pred_check
      _
    $region15: #{tpu_custom_call.1} parent=1 // pred_check_branch
      %58 = sbr.rel (0) target = $region17
    $region16: #{tpu_custom_call.1} parent=1 // pred_region
      %59 = dma.done [#allocation10], 256
    $region17: #{tpu_custom_call.1} parent=1 // pred_fallthru
      _
    %s60 = sadd.s32 0, 0
    %p61 = scmp.lt.s32.totalorder %s60, 0
    %s62 = scalar_select %p61, %s60, 0
    %s63 = smul.u32 2, %s62
    %s64 = sadd.s32 0, 0
    %p65 = scmp.lt.s32.totalorder %s64, 0
    %s66 = scalar_select %p65, %s64, 0
    %s67 = smul.u32 2, %s66
    %p68 = scmp.eq.s32.totalorder 0, 0
    // Predicated region
    $region18: #{tpu_custom_call.1} parent=1 // pred_check
      %p69 = pneg %p68
    $region19: #{tpu_custom_call.1} parent=1 // pred_check_branch
      %71 = sbr.rel (%p69) target = $region21
    $region20: #{tpu_custom_call.1} parent=1 // pred_region
      %72 = vst [vmem:[#allocation2] sm:$0xff] 0.0
      %73 = vst [vmem:[#allocation3] sm:$0xff] 0.0
    $region21: #{tpu_custom_call.1} parent=1 // pred_fallthru
      _
    %s74 = sadd.s32 0, 0
    %s75 = smul.u32 %s74, 16
    %s76 = sadd.s32 %s75, 16
    %s77 = sld [smem:[#allocation5]]
    %p78 = scmp.le.s32.totalorder %s76, %s77
    %p79 = scmp.lt.s32.totalorder %s75, %s77
    %p80 = scmp.gt.s32.totalorder %s76, %s77
    %p81 = pnand %p79, %p80
    %p82 = pneg %p81
    // Predicated region
    $region22: #{tpu_custom_call.1} parent=1 // pred_check
      %p83 = pneg %p78
    $region23: #{tpu_custom_call.1} parent=1 // pred_check_branch
      %85 = sbr.rel (%p83) target = $region25
    $region24: #{tpu_custom_call.1} parent=1 // pred_region
      %v86 = vld [vmem:[#allocation2] sm:$0xff]
      %v87 = vld [vmem:[#allocation6] sm:$0xff]
      %v88 = vld [vmem:[#allocation6 + $0x8] sm:$0xff]
      %v89 = vsub.f32 1.0, %v87
      %v90 = vsub.f32 1.0, %v88
      %v91 = vmax.f32 %v89, 0.0
      %v92 = vmax.f32 %v90, 0.0
      %v93 = vadd.f32 %v91, %v92
      %v94 = vadd.f32 %v86, %v93
      %95 = vst [vmem:[#allocation2] sm:$0xff] %v94
    $region25: #{tpu_custom_call.1} parent=1 // pred_fallthru
      _
    // Predicated region
    $region26: #{tpu_custom_call.1} parent=1 // pred_check
      _
    $region27: #{tpu_custom_call.1} parent=1 // pred_check_branch
      %97 = sbr.rel (%p81) target = $region29
    $region28: #{tpu_custom_call.1} parent=1 // pred_region
      %v98 = vld [vmem:[#allocation6] sm:$0xff]
      %v99 = vld [vmem:[#allocation6 + $0x8] sm:$0xff]
      %v100 = vsub.f32 1.0, %v98
      %v101 = vsub.f32 1.0, %v99
      %v102 = vmax.f32 %v100, 0.0
      %v103 = vmax.f32 %v101, 0.0
      %v104 = vlaneseq
      %v105 = vshrl.u32 %v104, 7
      %v106 = vadd.s32 %v105, 8
      %v107 = vstv %s75
      %v108 = vadd.s32 %v107, %v105
      %v109 = vadd.s32 %v107, %v106
      %v110 = vld [vmem:[#allocation2] sm:$0xff]
      %v111 = vstv %s77
      %vm112 = vcmp.lt.s32.totalorder %v108, %v111
      %vm113 = vcmp.lt.s32.totalorder %v109, %v111
      %v114 = vsel %vm112, %v102, 0.0
      %v115 = vsel %vm113, %v103, 0.0
      %v116 = vadd.f32 %v114, %v115
      %v117 = vadd.f32 %v110, %v116
      %118 = vst [vmem:[#allocation2] sm:$0xff] %v117
    $region29: #{tpu_custom_call.1} parent=1 // pred_fallthru
      _
    %s119 = sld [smem:[#allocation5 + $0x1]]
    %p120 = scmp.le.s32.totalorder %s76, %s119
    %p121 = scmp.lt.s32.totalorder %s75, %s119
    %p122 = scmp.gt.s32.totalorder %s76, %s119
    %p123 = pnand %p121, %p122
    %p124 = pneg %p123
    // Predicated region
    $region30: #{tpu_custom_call.1} parent=1 // pred_check
      %p125 = pneg %p120
    $region31: #{tpu_custom_call.1} parent=1 // pred_check_branch
      %127 = sbr.rel (%p125) target = $region33
    $region32: #{tpu_custom_call.1} parent=1 // pred_region
      %v128 = vld [vmem:[#allocation3] sm:$0xff]
      %v129 = vld [vmem:[#allocation9] sm:$0xff]
      %v130 = vld [vmem:[#allocation9 + $0x8] sm:$0xff]
      %v131 = vadd.f32 %v129, 1.0
      %v132 = vadd.f32 %v130, 1.0
      %v133 = vmax.f32 %v131, 0.0
      %v134 = vmax.f32 %v132, 0.0
      %v135 = vadd.f32 %v133, %v134
      %v136 = vadd.f32 %v128, %v135
      %137 = vst [vmem:[#allocation3] sm:$0xff] %v136
    $region33: #{tpu_custom_call.1} parent=1 // pred_fallthru
      _
    // Predicated region
    $region34: #{tpu_custom_call.1} parent=1 // pred_check
      _
    $region35: #{tpu_custom_call.1} parent=1 // pred_check_branch
      %139 = sbr.rel (%p123) target = $region37
    $region36: #{tpu_custom_call.1} parent=1 // pred_region
      %v140 = vld [vmem:[#allocation9] sm:$0xff]
      %v141 = vld [vmem:[#allocation9 + $0x8] sm:$0xff]
      %v142 = vadd.f32 %v140, 1.0
      %v143 = vadd.f32 %v141, 1.0
      %v144 = vmax.f32 %v142, 0.0
      %v145 = vmax.f32 %v143, 0.0
      %v146 = vlaneseq
      %v147 = vshrl.u32 %v146, 7
      %v148 = vadd.s32 %v147, 8
      %v149 = vstv %s75
      %v150 = vadd.s32 %v149, %v147
      %v151 = vadd.s32 %v149, %v148
      %v152 = vld [vmem:[#allocation3] sm:$0xff]
      %v153 = vstv %s119
      %vm154 = vcmp.lt.s32.totalorder %v150, %v153
      %vm155 = vcmp.lt.s32.totalorder %v151, %v153
      %v156 = vsel %vm154, %v144, 0.0
      %v157 = vsel %vm155, %v145, 0.0
      %v158 = vadd.f32 %v156, %v157
      %v159 = vadd.f32 %v152, %v158
      %160 = vst [vmem:[#allocation3] sm:$0xff] %v159
    $region37: #{tpu_custom_call.1} parent=1 // pred_fallthru
      _
    // Predicated region
    $region38: #{tpu_custom_call.1} parent=1 // pred_check
      %p161 = pneg %p68
    $region39: #{tpu_custom_call.1} parent=1 // pred_check_branch
      %163 = sbr.rel (%p161) target = $region41
    $region40: #{tpu_custom_call.1} parent=1 // pred_region
      %v164 = vld [vmem:[#allocation2] sm:$0xff]
      %165 = vst [vmem:[#allocation11] sm:$0xff] %v164
      %v166 = vld [vmem:[#allocation3] sm:$0xff]
      %167 = vst [vmem:[#allocation12] sm:$0xff] %v166
    $region41: #{tpu_custom_call.1} parent=1 // pred_fallthru
      _
    // Predicated region
    $region42: #{tpu_custom_call.1} parent=1 // pred_check
      _
    $region43: #{tpu_custom_call.1} parent=1 // pred_check_branch
      %169 = sbr.rel (0) target = $region45
    $region44: #{tpu_custom_call.1} parent=1 // pred_region
      %s171 = ssub.s32 128, 128
      %172 = vsyncadd [#allocation8], %s171
      %s174 = sshll.u32 [#allocation11], 4
      %s175 = int_to_ptr.vmem [resolvable:$true] %s174
      %177 = dma.vmem_to_hbm [thread:$0]  %s175, 128, %s3, [#allocation8]
    $region45: #{tpu_custom_call.1} parent=1 // pred_fallthru
      _
    // Predicated region
    $region46: #{tpu_custom_call.1} parent=1 // pred_check
      _
    $region47: #{tpu_custom_call.1} parent=1 // pred_check_branch
      %179 = sbr.rel (0) target = $region49
    $region48: #{tpu_custom_call.1} parent=1 // pred_region
      %s181 = ssub.s32 128, 128
      %182 = vsyncadd [#allocation13], %s181
      %s184 = sshll.u32 [#allocation12], 4
      %s185 = int_to_ptr.vmem [resolvable:$true] %s184
      %187 = dma.vmem_to_hbm [thread:$0]  %s185, 128, %s4, [#allocation13]
    $region49: #{tpu_custom_call.1} parent=1 // pred_fallthru
      _
    // Predicated region
    $region50: #{tpu_custom_call.1} parent=1 // pred_check
      _
    $region51: #{tpu_custom_call.1} parent=1 // pred_check_branch
      %189 = sbr.rel (0) target = $region53
    $region52: #{tpu_custom_call.1} parent=1 // pred_region
      %190 = dma.done [#allocation8], 128
    $region53: #{tpu_custom_call.1} parent=1 // pred_fallthru
      _
    // Predicated region
    $region54: #{tpu_custom_call.1} parent=1 // pred_check
      _
    $region55: #{tpu_custom_call.1} parent=1 // pred_check_branch
      %192 = sbr.rel (0) target = $region57
    $region56: #{tpu_custom_call.1} parent=1 // pred_region
      %193 = dma.done [#allocation13], 128
    $region57: #{tpu_custom_call.1} parent=1 // pred_fallthru
      _
    %194 = vsyncpa [#allocation7], 1
    %195 = vsyncpa [#allocation10], 1
    %196 = vsyncpa [#allocation8], 1
    %197 = vsyncpa [#allocation13], 1

</llo_original>
